<compile_context>
chip_gen: v7x
topology: tpu7x:2x2x1
jax: 0.10.0
libtpu: 0.0.40
codegen_flags: <defaults>
</compile_context>

<pallas_src>
import functools

import jax
import jax.numpy as jnp
from jax.experimental import pallas as pl
from jax.experimental.pallas import tpu as pltpu

_LANE = 128      # vreg lane width   (last dim)
_SUBLANE = 8     # vreg sublane rows (second-to-last dim)


def _act_kernel(x_ref, o_ref, *, act, alpha):
    # x_ref / o_ref : (block_rows, 128) VMEM tiles, lane-dense.
    x = x_ref[...]
    if act == "none":
        y = x
    elif act == "sigmoid":
        # VariantSigmoid: 1 / (1 + exp(-alpha * x))
        y = 1.0 / (1.0 + jnp.exp(-alpha * x))
    elif act == "tanh":
        y = jnp.tanh(x)
    else:
        raise ValueError(f"unknown activation: {act}")
    o_ref[...] = y.astype(o_ref.dtype)


def activation_forward(x, act, params=None, *, block_rows=1024):
    """Activation.forward for act in {'none', 'sigmoid', 'tanh'}.

    x      : any-shaped float array
    act    : 'none' | 'sigmoid' | 'tanh'
    params : dict; {'alpha': ...} for 'sigmoid', {} otherwise
    returns: same shape/dtype as x
    """
    if act not in ("none", "sigmoid", "tanh"):
        raise ValueError(f"unknown activation: {act}")
    params = params or {}
    alpha = float(params.get("alpha", 1.0))

    orig_shape = x.shape
    orig_dtype = x.dtype
    n = x.size

    # --- glue: reshape/pad to a lane-dense 2-D slab (rows_pad, 128) -----------
    cols = _LANE
    rows = pl.cdiv(n, cols)
    # round rows up to the sublane count (8) so tiles are full (8,128) vregs
    rows = ((rows + _SUBLANE - 1) // _SUBLANE) * _SUBLANE

    # Row-block: big enough to amortize per-grid-step overhead, small enough
    # that double-buffered in+out tiles are tiny vs. the VMEM limit
    # (1024 x 128 f32 = 512 KiB per buffer -> ~2 MiB total double-buffered).
    br = min(block_rows, rows)
    br = max(_SUBLANE, (br // _SUBLANE) * _SUBLANE)
    rows_pad = ((rows + br - 1) // br) * br          # grid divides evenly
    n_pad = rows_pad * cols

    flat = x.reshape(-1)
    if n_pad != n:
        flat = jnp.pad(flat, (0, n_pad - n))
    x2 = flat.reshape(rows_pad, cols)

    kernel = functools.partial(_act_kernel, act=act, alpha=alpha)

    out2 = pl.pallas_call(
        kernel,
        out_shape=jax.ShapeDtypeStruct((rows_pad, cols), orig_dtype),
        grid_spec=pltpu.PrefetchScalarGridSpec(
            num_scalar_prefetch=0,
            grid=(rows_pad // br,),
            in_specs=[pl.BlockSpec((br, cols), lambda i: (i, 0))],
            out_specs=pl.BlockSpec((br, cols), lambda i: (i, 0)),
        ),
        compiler_params=pltpu.CompilerParams(
            dimension_semantics=("parallel",),
        ),
    )(x2)

    out_flat = out2.reshape(-1)
    if n_pad != n:
        out_flat = out_flat[:n]
    return out_flat.reshape(orig_shape)


if __name__ == "__main__":
    # Example input consistent with an activation module: x of shape (2, 4, 16, 16)
    key = jax.random.PRNGKey(0)
    x = jax.random.normal(key, (2, 4, 16, 16), dtype=jnp.float32)

    alpha = 1.5

    # Activation('sigmoid', {'alpha': alpha})
    out_sig = jax.block_until_ready(
        activation_forward(x, "sigmoid", {"alpha": alpha}))
    ref_sig = 1.0 / (1.0 + jnp.exp(-alpha * x))
    assert out_sig.shape == x.shape and out_sig.dtype == x.dtype
    assert jnp.allclose(out_sig, ref_sig, atol=1e-6, rtol=1e-6), \
        float(jnp.max(jnp.abs(out_sig - ref_sig)))

    # Activation('tanh', {})
    out_tanh = jax.block_until_ready(activation_forward(x, "tanh", {}))
    ref_tanh = jnp.tanh(x)
    assert jnp.allclose(out_tanh, ref_tanh, atol=1e-6, rtol=1e-6), \
        float(jnp.max(jnp.abs(out_tanh - ref_tanh)))

    # Activation('none', {})
    out_none = jax.block_until_ready(activation_forward(x, "none", {}))
    assert jnp.allclose(out_none, x), "NoneAct must be identity"

    print("KERNEL_OK")
</pallas_src>

<mosaic_0001>
module attributes {stable_mosaic.version = 11 : i64} {
  func.func @_act_kernel(%arg0: i32, %arg1: memref<16x128xf32, #tpu.memory_space<vmem>>, %arg2: memref<16x128xf32, #tpu.memory_space<vmem>>) attributes {dimension_semantics = [#tpu.dimension_semantics<parallel>], iteration_bounds = array<i64: 1>, scalar_prefetch = 0 : i64, scratch_operands = 0 : i64, tpu.core_type = #tpu.core_type<tc>, window_params = [{transform_indices = @transform_0, window_bounds = array<i64: 16, 128>}, {transform_indices = @transform_1, window_bounds = array<i64: 16, 128>}]} {
    %c0 = arith.constant 0 : index
    %c0_0 = arith.constant 0 : index
    %0 = vector.load %arg1[%c0, %c0_0] : memref<16x128xf32, #tpu.memory_space<vmem>>, vector<16x128xf32>
    %cst = arith.constant -1.500000e+00 : f32
    %1 = vector.broadcast %cst : f32 to vector<16x128xf32>
    %2 = arith.mulf %1, %0 : vector<16x128xf32>
    %3 = math.exp %2 : vector<16x128xf32>
    %cst_1 = arith.constant 1.000000e+00 : f32
    %4 = vector.broadcast %cst_1 : f32 to vector<16x128xf32>
    %5 = arith.addf %4, %3 : vector<16x128xf32>
    %cst_2 = arith.constant 1.000000e+00 : f32
    %6 = vector.broadcast %cst_2 : f32 to vector<16x128xf32>
    %7 = arith.divf %6, %5 : vector<16x128xf32>
    %c0_3 = arith.constant 0 : index
    %c0_4 = arith.constant 0 : index
    %8 = vector.load %arg2[%c0_3, %c0_4] : memref<16x128xf32, #tpu.memory_space<vmem>>, vector<16x128xf32>
    tpu.vector_store %arg2[%c0_3, %c0_4], %7 {strides = array<i32>} : memref<16x128xf32, #tpu.memory_space<vmem>>, vector<16x128xf32>,
    return
  }
  func.func @transform_0(%arg0: i32) -> (i32, i32) {
    %c0_i32 = arith.constant 0 : i32
    %c0_i32_0 = arith.constant 0 : i32
    return %arg0, %c0_i32 : i32, i32
  }
  func.func @transform_1(%arg0: i32) -> (i32, i32) {
    %c0_i32 = arith.constant 0 : i32
    %c0_i32_0 = arith.constant 0 : i32
    return %arg0, %c0_i32 : i32, i32
  }
}

</mosaic_0001>

<llo_original>
// kernel: tpu_custom_call.1
$region0: #{tpu_custom_call.1}
  #allocation0 [shape = 'u32[]', space=smem, size = 0x4, offset = 0x4, fixed_abs, tag = 'smem constant byte address 0x4 - core index']
  #allocation1 [shape = 'u32[144,128]{1,0:T(1,128)}', space=vmem, size = 0x12000, scoped, tag = 'internal scratch']
  %s0 = inlined_call_operand.hbm [shape: f32[16,128], index: 0, kind: input, shape index: {}]
  %s1 = inlined_call_operand.hbm [shape: f32[16,128], index: 1, kind: output, shape index: {}]
  %s2 = sld [smem:[#allocation0]]
  $region18: #{tpu_custom_call.1} parent=0
    _
  %s4 = ssub.s32 1, %s2
  %s5 = scalar_select 0, %s4, %s2
  $region1: #{tpu_custom_call.1} parent=0
    #allocation2 [shape = 'u8[8192]{0}', space=vmem, size = 0x2000, scoped, tag = 'input window, operand 0, single buffered']
    #allocation3 [shape = 's32[1]{0}', space=sflag, size = 0x4, scoped, tag = 'scoped memory for tpu_custom_call.1']
    #allocation4 [shape = 's32[1]{0}', space=sflag, size = 0x4, scoped, tag = 'scoped memory for tpu_custom_call.1']
    #allocation5 [shape = 'u8[8192]{0}', space=vmem, size = 0x2000, scoped, tag = 'output window, operand 0, single buffered']
    %6 = vsyncpa [#allocation3], 0
    %7 = vsyncpa [#allocation4], 0
    // Predicated region
    $region2: #{tpu_custom_call.1} parent=1 // pred_check
      _
    $region3: #{tpu_custom_call.1} parent=1 // pred_check_branch
      %9 = sbr.rel (0) target = $region5
    $region4: #{tpu_custom_call.1} parent=1 // pred_region
      %s11 = ssub.s32 256, 256
      %12 = vsyncadd [#allocation3], %s11
      %s13 = sshll.u32 [#allocation2], 4
      %s14 = int_to_ptr.vmem [resolvable:$true] %s13
      %19 = dma.hbm_to_vmem [thread:$0]  %s0, 256, %s14, [#allocation3], 128, 128, 8
    $region5: #{tpu_custom_call.1} parent=1 // pred_fallthru
      _
    // Predicated region
    $region6: #{tpu_custom_call.1} parent=1 // pred_check
      _
    $region7: #{tpu_custom_call.1} parent=1 // pred_check_branch
      %21 = sbr.rel (0) target = $region9
    $region8: #{tpu_custom_call.1} parent=1 // pred_region
      %22 = dma.done [#allocation3], 256
    $region9: #{tpu_custom_call.1} parent=1 // pred_fallthru
      _
    %v23 = vld [vmem:[#allocation2] sm:$0xff]
    %v24 = vld [vmem:[#allocation2 + $0x8] sm:$0xff]
    %v25 = vmul.f32 %v23, -1.5
    %v26 = vmul.f32 %v24, -1.5
    %v27 = vmul.f32 %v25, 1.442695
    %v28 = vpow.pop %v27
    %v29 = vmul.f32 %v26, 1.442695
    %v30 = vpow.pop %v29
    %v31 = vadd.f32 %v28, 1.0
    %v32 = vadd.f32 %v30, 1.0
    %v33 = vrcp.pop %v31
    %v34 = vmul.f32 1.0, %v33
    %v35 = vrcp.pop %v32
    %v36 = vmul.f32 1.0, %v35
    %37 = vst [vmem:[#allocation5] sm:$0xff] %v34
    %38 = vst [vmem:[#allocation5 + $0x8] sm:$0xff] %v36
    // Predicated region
    $region10: #{tpu_custom_call.1} parent=1 // pred_check
      _
    $region11: #{tpu_custom_call.1} parent=1 // pred_check_branch
      %40 = sbr.rel (0) target = $region13
    $region12: #{tpu_custom_call.1} parent=1 // pred_region
      %s42 = ssub.s32 256, 256
      %43 = vsyncadd [#allocation4], %s42
      %s44 = sshll.u32 [#allocation5], 4
      %s45 = int_to_ptr.vmem [resolvable:$true] %s44
      %50 = dma.vmem_to_hbm [thread:$0]  %s45, 256, %s1, [#allocation4], 128, 128, 8
    $region13: #{tpu_custom_call.1} parent=1 // pred_fallthru
      _
    // Predicated region
    $region14: #{tpu_custom_call.1} parent=1 // pred_check
      _
    $region15: #{tpu_custom_call.1} parent=1 // pred_check_branch
      %52 = sbr.rel (0) target = $region17
    $region16: #{tpu_custom_call.1} parent=1 // pred_region
      %53 = dma.done [#allocation4], 256
    $region17: #{tpu_custom_call.1} parent=1 // pred_fallthru
      _
    %54 = vsyncpa [#allocation3], 1
    %55 = vsyncpa [#allocation4], 1

</llo_original>
